<compile_context>
chip_gen: v6e
topology: v6e:2x2x1
jax: 0.10.0
libtpu: 0.0.40
codegen_flags: <defaults>
</compile_context>

<pallas_src>
import math
from functools import partial

import jax
import jax.numpy as jnp
from jax import lax
from jax.experimental import pallas as pl
from jax.experimental.pallas import tpu as pltpu

_MASK_VALUE = -1e30  # large finite negative (avoids exp(-inf - -inf) NaNs)


def _prefers_256_contraction():
    """Best-effort: v6e/v7x MXUs are 256-deep -> prefer kv tiles of 256."""
    try:
        kind = jax.devices()[0].device_kind.lower()
    except Exception:
        return False
    return ("v6" in kind) or ("v7" in kind)


def _default_vmem_limit_bytes():
    """Scoped-VMEM budget: ~3/4 of physical capacity, capped at 100 MiB.

    v5e/v6e (128 MiB physical) -> 96 MiB; v7x (64 MiB physical) -> 48 MiB.
    Falls back to a 32 MiB conservative limit if the query is unavailable.
    """
    try:
        cap = int(pltpu.get_tpu_info().vmem_capacity_bytes)
        return int(min(cap * 3 // 4, 100 * 1024 * 1024))
    except Exception:
        return 32 * 1024 * 1024


# -----------------------------------------------------------------------------
# Kernel A: fused QKV projection, d_in-tiled, emits q/k/v separately.
# -----------------------------------------------------------------------------
def qkv_proj_kernel(x_ref, w_ref, q_ref, k_ref, v_ref, acc_ref, *, d_out):
    # x_ref:   (1, tm, tkk)
    # w_ref:   (tkk, 3*d_out)  -- pre-transposed; Q columns pre-scaled by 1/sqrt(hd)
    # q/k/v_ref: (1, tm, d_out) -- lane-dense token-major outputs
    # acc_ref: (tm, 3*d_out) f32 scratch accumulator
    kk = pl.program_id(2)

    @pl.when(kk == 0)
    def _init():
        acc_ref[...] = jnp.zeros_like(acc_ref)

    x = x_ref[0].astype(w_ref.dtype)
    acc_ref[...] += jnp.dot(x, w_ref[...], preferred_element_type=jnp.float32)

    @pl.when(kk == pl.num_programs(2) - 1)
    def _emit():
        acc = acc_ref[...]
        # Static lane slices: split the fused [q|k|v] feature axis. No extra
        # HBM traffic vs a single 3*d_out output, and no head-split transpose
        # round trip in the wrapper afterwards.
        q_ref[0] = acc[:, 0 * d_out:1 * d_out].astype(q_ref.dtype)
        k_ref[0] = acc[:, 1 * d_out:2 * d_out].astype(k_ref.dtype)
        v_ref[0] = acc[:, 2 * d_out:3 * d_out].astype(v_ref.dtype)


# -----------------------------------------------------------------------------
# Kernel B: causal flash attention (online softmax) + fused output projection.
# -----------------------------------------------------------------------------
def flash_attn_proj_kernel(q_ref, k_ref, v_ref, wp_ref, bp_ref, o_ref,
                           m_sc, l_sc, acc_sc, *,
                           tq, tk, num_heads, head_dim, d_out, compute_dtype):
    # q_ref: (1, tq, d_out)  k_ref/v_ref: (1, tk, d_out)   (token-major; heads
    #        are contiguous lane windows of width head_dim)
    # wp_ref: (num_heads, head_dim, d_out) -- per-head slabs of W_proj^T
    # bp_ref: (1, d_out)     o_ref: (1, tq, d_out)
    # scratch: m_sc/l_sc (H, tq, 1) f32, acc_sc (H, tq, head_dim) f32
    qi = pl.program_id(1)
    ki = pl.program_id(2)
    nk = pl.num_programs(2)
    q_start = qi * tq
    k_start = ki * tk

    @pl.when(ki == 0)
    def _init():
        m_sc[...] = jnp.full(m_sc.shape, _MASK_VALUE, dtype=m_sc.dtype)
        l_sc[...] = jnp.zeros(l_sc.shape, dtype=l_sc.dtype)
        acc_sc[...] = jnp.zeros(acc_sc.shape, dtype=acc_sc.dtype)

    def online_softmax_update(apply_mask):
        # Shared traced body; `apply_mask` is a static Python bool, so the
        # interior-tile branch carries no iota/compare/select at all.
        q2 = q_ref[0]          # (tq, d_out), Q already scaled by 1/sqrt(hd)
        k2 = k_ref[0]          # (tk, d_out)
        v2 = v_ref[0]          # (tk, d_out)
        if apply_mask:
            row = lax.broadcasted_iota(jnp.int32, (tq, tk), 0) + q_start
            col = lax.broadcasted_iota(jnp.int32, (tq, tk), 1) + k_start
            keep = row >= col
        # Per-head 2-D matmuls: a head-batched einsum is a serial MXU loop
        # anyway; looping bounds per-iteration vreg pressure to one (tq, tk)
        # score tile and needs no relayouts (heads are static lane slices).
        for h in range(num_heads):
            sl = slice(h * head_dim, (h + 1) * head_dim)
            s = lax.dot_general(q2[:, sl], k2[:, sl],
                                (((1,), (1,)), ((), ())),
                                preferred_element_type=jnp.float32)  # (tq, tk)
            if apply_mask:
                s = jnp.where(keep, s, _MASK_VALUE)
            # NOTE: the -1e30 init of m_sc is safe because the kv axis runs in
            # order from ki=0 and (causal) column 0 is valid for every row, so
            # m_prev is always a real value before a fully-masked row can occur.
            m_prev = m_sc[h]
            m_new = jnp.maximum(m_prev, s.max(axis=-1, keepdims=True))
            alpha = jnp.exp(m_prev - m_new)
            p = jnp.exp(s - m_new)
            l_sc[h] = alpha * l_sc[h] + p.sum(axis=-1, keepdims=True)
            acc_sc[h] = alpha * acc_sc[h] + lax.dot_general(
                p.astype(compute_dtype), v2[:, sl],
                (((1,), (0,)), ((), ())),
                preferred_element_type=jnp.float32)
            m_sc[h] = m_new

    contributes = k_start < q_start + tq            # tile touches the causal region
    fully_unmasked = (k_start + tk - 1) <= q_start  # strictly below the diagonal

    @pl.when(jnp.logical_and(contributes, fully_unmasked))
    def _interior():
        online_softmax_update(apply_mask=False)

    @pl.when(jnp.logical_and(contributes, jnp.logical_not(fully_unmasked)))
    def _diagonal():
        online_softmax_update(apply_mask=True)

    @pl.when(ki == nk - 1)
    def _finalize():
        # Deferred softmax normalization + fused per-head output projection,
        # accumulated into a lane-dense [tq, d_out] tile.
        out = jnp.zeros((tq, d_out), dtype=jnp.float32)
        for h in range(num_heads):
            inv_l = pl.reciprocal(l_sc[h], approx=True)      # EUP slot, ~free
            ctx = (acc_sc[h] * inv_l).astype(compute_dtype)  # (tq, head_dim)
            out = out + lax.dot_general(ctx, wp_ref[h],
                                        (((1,), (0,)), ((), ())),
                                        preferred_element_type=jnp.float32)
        o_ref[0] = (out + bp_ref[...]).astype(o_ref.dtype)


# -----------------------------------------------------------------------------
# Wrapper
# -----------------------------------------------------------------------------
def mha_forward(x, w_qkv, w_proj, b_proj, num_heads, *,
                q_block=128, kv_block=None, proj_block=128, dk_block=512,
                compute_dtype=None, vmem_limit_bytes=None):
    B, T, d_in = x.shape
    d_out = w_proj.shape[0]
    assert d_out % num_heads == 0, "d_out must be divisible by num_heads"
    H = num_heads
    hd = d_out // H
    scale = 1.0 / math.sqrt(hd)

    if compute_dtype is None:
        compute_dtype = x.dtype   # pass jnp.bfloat16 for native MXU rate on f32 inputs
    if kv_block is None:
        kv_block = 256 if _prefers_256_contraction() else 128
    if vmem_limit_bytes is None:
        vmem_limit_bytes = _default_vmem_limit_bytes()

    tm = min(proj_block, T)
    tq = min(q_block, T)
    tk = min(kv_block, T)
    tkk = min(dk_block, d_in)
    assert T % tm == 0 and T % tq == 0 and T % tk == 0
    assert d_in % tkk == 0

    # Host-side weight prep (no in-kernel transposes, no per-step scaling):
    #   * QKV weight pre-transposed to [d_in, 3*d_out];
    #   * 1/sqrt(head_dim) folded into the Q columns (scaled in f32, then cast);
    #   * output projection pre-split per head: W_proj^T as [H, hd, d_out].
    col_scale = jnp.concatenate(
        [jnp.full((d_out,), scale, dtype=w_qkv.dtype),
         jnp.ones((2 * d_out,), dtype=w_qkv.dtype)])
    w_qkv_t = (jnp.transpose(w_qkv) * col_scale[None, :]).astype(compute_dtype)
    w_proj_h = jnp.transpose(w_proj).reshape(H, hd, d_out).astype(compute_dtype)
    b2 = b_proj.reshape(1, d_out)

    # ---- Kernel A: fused QKV projection (d_in-tiled accumulation) ----------
    # Emits q/k/v as three token-major [B, T, d_out] arrays already in
    # compute_dtype -> NO head-split transpose / extra HBM round trip between
    # the two kernels, and no per-kv-step casts in kernel B.
    qkv_out_shape = tuple(jax.ShapeDtypeStruct((B, T, d_out), compute_dtype)
                          for _ in range(3))
    qkv_out_spec = pl.BlockSpec((1, tm, d_out), lambda b, t, kk: (b, t, 0))
    q, k, v = pl.pallas_call(
        partial(qkv_proj_kernel, d_out=d_out),
        out_shape=qkv_out_shape,
        grid=(B, T // tm, d_in // tkk),
        in_specs=[
            pl.BlockSpec((1, tm, tkk), lambda b, t, kk: (b, t, kk)),
            pl.BlockSpec((tkk, 3 * d_out), lambda b, t, kk: (kk, 0)),
        ],
        out_specs=[qkv_out_spec, qkv_out_spec, qkv_out_spec],
        scratch_shapes=[pltpu.VMEM((tm, 3 * d_out), jnp.float32)],
        compiler_params=pltpu.CompilerParams(
            dimension_semantics=("parallel", "parallel", "arbitrary"),
            vmem_limit_bytes=vmem_limit_bytes),
    )(x, w_qkv_t)

    # ---- Kernel B: causal flash attention + fused output projection --------
    def last_needed_kv_block(qi):
        return (qi * tq + tq - 1) // tk

    def q_map(b, qi, ki):
        return (b, qi, 0)

    def kv_map(b, qi, ki):
        # Clamp causally-skipped kv tiles to the last needed block index so the
        # pipeline re-uses the previous tile instead of issuing a fresh DMA
        # (~2x K/V HBM traffic reduction for causal attention).
        return (b, jnp.minimum(ki, last_needed_kv_block(qi)), 0)

    kernel = partial(flash_attn_proj_kernel, tq=tq, tk=tk, num_heads=H,
                     head_dim=hd, d_out=d_out, compute_dtype=compute_dtype)
    # TODO(synk): v7x (64 MiB VMEM) with very large d_out: keep weights bf16
    # and/or tile wp_ref's d_out axis; on v5e consider pipeline_mode=
    # pl.Buffered(3) on the k/v BlockSpecs to hide K/V DMA latency.
    out = pl.pallas_call(
        kernel,
        out_shape=jax.ShapeDtypeStruct((B, T, d_out), x.dtype),
        grid=(B, T // tq, T // tk),
        in_specs=[
            pl.BlockSpec((1, tq, d_out), q_map),
            pl.BlockSpec((1, tk, d_out), kv_map),
            pl.BlockSpec((1, tk, d_out), kv_map),
            pl.BlockSpec((H, hd, d_out), lambda b, qi, ki: (0, 0, 0)),
            pl.BlockSpec((1, d_out), lambda b, qi, ki: (0, 0)),
        ],
        out_specs=pl.BlockSpec((1, tq, d_out), lambda b, qi, ki: (b, qi, 0)),
        scratch_shapes=[
            pltpu.VMEM((H, tq, 1), jnp.float32),    # running max m
            pltpu.VMEM((H, tq, 1), jnp.float32),    # running denom l
            pltpu.VMEM((H, tq, hd), jnp.float32),   # unnormalized context acc
        ],
        compiler_params=pltpu.CompilerParams(
            dimension_semantics=("parallel", "parallel", "arbitrary"),
            vmem_limit_bytes=vmem_limit_bytes),
    )(q, k, v, w_proj_h, b2)
    return out


# -----------------------------------------------------------------------------
# Pure-JAX reference mirroring the PyTorch forward (eval mode, dropout = 0).
# -----------------------------------------------------------------------------
def mha_reference(x, w_qkv, w_proj, b_proj, num_heads):
    B, T, d_in = x.shape
    d_out = w_proj.shape[0]
    hd = d_out // num_heads
    qkv = jnp.einsum('btd,ed->bte', x, w_qkv)                # [B, T, 3*d_out]
    qkv = qkv.reshape(B, T, 3, num_heads, hd)
    qkv = jnp.transpose(qkv, (2, 0, 3, 1, 4))                # [3, B, H, T, hd]
    q, k, v = qkv[0], qkv[1], qkv[2]
    s = jnp.einsum('bhqd,bhkd->bhqk', q, k) / math.sqrt(hd)
    mask = jnp.tril(jnp.ones((T, T), dtype=bool))
    s = jnp.where(mask, s, -jnp.inf)
    a = jax.nn.softmax(s, axis=-1)
    ctx = jnp.einsum('bhqk,bhkd->bhqd', a, v)
    ctx = jnp.transpose(ctx, (0, 2, 1, 3)).reshape(B, T, d_out)
    return jnp.einsum('btd,ed->bte', ctx, w_proj) + b_proj


if __name__ == "__main__":
    # Small shapes consistent with the module; T=16 with 8-wide tiles exercises
    # multi-tile online softmax, the causal tile skip, and the kv-DMA clamping.
    B, T = 2, 16
    d_in, d_out, num_heads = 32, 32, 4

    key = jax.random.PRNGKey(0)
    kx, kq, kp, kb = jax.random.split(key, 4)

    x = jax.random.normal(kx, (B, T, d_in), dtype=jnp.float32)
    w_qkv = jax.random.normal(kq, (3 * d_out, d_in), dtype=jnp.float32) * 0.05
    w_proj = jax.random.normal(kp, (d_out, d_out), dtype=jnp.float32) * 0.05
    b_proj = jax.random.normal(kb, (d_out,), dtype=jnp.float32) * 0.05

    ref = mha_reference(x, w_qkv, w_proj, b_proj, num_heads)

    # f32 compute path (tight tolerance; approx reciprocal is the only approx).
    out = mha_forward(x, w_qkv, w_proj, b_proj, num_heads,
                      q_block=8, kv_block=8, proj_block=8)
    out = jax.block_until_ready(out)
    assert out.shape == (B, T, d_out)
    assert jnp.allclose(out, ref, atol=2e-3, rtol=2e-3), "f32 mismatch vs reference"

    # bf16 MXU-input path (f32 accumulation; looser tolerance).
    out_bf16 = mha_forward(x, w_qkv, w_proj, b_proj, num_heads,
                           q_block=8, kv_block=8, proj_block=8,
                           compute_dtype=jnp.bfloat16)
    out_bf16 = jax.block_until_ready(out_bf16)
    assert jnp.allclose(out_bf16, ref, atol=3e-2, rtol=3e-2), "bf16 mismatch vs reference"

    print("KERNEL_OK")
</pallas_src>

<mosaic_0001>
module attributes {stable_mosaic.version = 11 : i64} {
  func.func @qkv_proj_kernel(%arg0: i32, %arg1: i32, %arg2: i32, %arg3: memref<1x8x32xf32, #tpu.memory_space<vmem>>, %arg4: memref<32x96xf32, #tpu.memory_space<vmem>>, %arg5: memref<1x8x32xf32, #tpu.memory_space<vmem>>, %arg6: memref<1x8x32xf32, #tpu.memory_space<vmem>>, %arg7: memref<1x8x32xf32, #tpu.memory_space<vmem>>, %arg8: memref<8x96xf32, #tpu.memory_space<vmem>>) attributes {dimension_semantics = [#tpu.dimension_semantics<parallel>, #tpu.dimension_semantics<parallel>, #tpu.dimension_semantics<arbitrary>], iteration_bounds = array<i64: 2, 2, 1>, scalar_prefetch = 0 : i64, scratch_operands = 1 : i64, tpu.core_type = #tpu.core_type<tc>, window_params = [{transform_indices = @transform_0, window_bounds = array<i64: 1, 8, 32>}, {transform_indices = @transform_1, window_bounds = array<i64: 32, 96>}, {transform_indices = @transform_2, window_bounds = array<i64: 1, 8, 32>}, {transform_indices = @transform_3, window_bounds = array<i64: 1, 8, 32>}, {transform_indices = @transform_4, window_bounds = array<i64: 1, 8, 32>}]} {
    %c0_i32 = arith.constant 0 : i32
    %0 = arith.cmpi eq, %arg2, %c0_i32 : i32
    %1 = arith.extui %0 : i1 to i32
    %c0_i32_0 = arith.constant 0 : i32
    %2 = arith.cmpi ne, %1, %c0_i32_0 : i32
    scf.if %2 {
      %cst_11 = arith.constant 0.000000e+00 : f32
      %13 = vector.broadcast %cst_11 : f32 to vector<8x96xf32>
      %c0_12 = arith.constant 0 : index
      %c0_13 = arith.constant 0 : index
      %14 = vector.load %arg8[%c0_12, %c0_13] : memref<8x96xf32, #tpu.memory_space<vmem>>, vector<8x96xf32>
      tpu.vector_store %arg8[%c0_12, %c0_13], %13 {strides = array<i32>} : memref<8x96xf32, #tpu.memory_space<vmem>>, vector<8x96xf32>,
    } else {
    }
    %c0 = arith.constant 0 : index
    %c0_1 = arith.constant 0 : index
    %c0_2 = arith.constant 0 : index
    %3 = vector.load %arg3[%c0, %c0_1, %c0_2] : memref<1x8x32xf32, #tpu.memory_space<vmem>>, vector<1x8x32xf32>
    %4 = vector.shape_cast %3 : vector<1x8x32xf32> to vector<8x32xf32>
    %c0_3 = arith.constant 0 : index
    %c0_4 = arith.constant 0 : index
    %5 = vector.load %arg8[%c0_3, %c0_4] : memref<8x96xf32, #tpu.memory_space<vmem>>, vector<8x96xf32>
    %c0_5 = arith.constant 0 : index
    %c0_6 = arith.constant 0 : index
    %6 = vector.load %arg4[%c0_5, %c0_6] : memref<32x96xf32, #tpu.memory_space<vmem>>, vector<32x96xf32>
    %cst = arith.constant dense<0.000000e+00> : vector<8x96xf32>
    %7 = tpu.matmul %4, %6, %cst {dimension_numbers = #tpu.dot_dimension_numbers<[1], [0], [0], [1], [0, 0, 1, 1], [], []>} : vector<8x32xf32>, vector<32x96xf32>, vector<8x96xf32> -> vector<8x96xf32>
    %8 = arith.addf %5, %7 : vector<8x96xf32>
    %c0_7 = arith.constant 0 : index
    %c0_8 = arith.constant 0 : index
    %9 = vector.load %arg8[%c0_7, %c0_8] : memref<8x96xf32, #tpu.memory_space<vmem>>, vector<8x96xf32>
    tpu.vector_store %arg8[%c0_7, %c0_8], %8 {strides = array<i32>} : memref<8x96xf32, #tpu.memory_space<vmem>>, vector<8x96xf32>,
    %c0_i32_9 = arith.constant 0 : i32
    %10 = arith.cmpi eq, %arg2, %c0_i32_9 : i32
    %11 = arith.extui %10 : i1 to i32
    %c0_i32_10 = arith.constant 0 : i32
    %12 = arith.cmpi ne, %11, %c0_i32_10 : i32
    scf.if %12 {
      %c0_11 = arith.constant 0 : index
      %c0_12 = arith.constant 0 : index
      %13 = vector.load %arg8[%c0_11, %c0_12] : memref<8x96xf32, #tpu.memory_space<vmem>>, vector<8x96xf32>
      %14 = vector.extract_strided_slice %13 {offsets = [0, 0], sizes = [8, 32], strides = [1, 1]} : vector<8x96xf32> to vector<8x32xf32>
      %c0_13 = arith.constant 0 : index
      %c0_14 = arith.constant 0 : index
      %c0_15 = arith.constant 0 : index
      %15 = vector.load %arg5[%c0_13, %c0_14, %c0_15] : memref<1x8x32xf32, #tpu.memory_space<vmem>>, vector<1x8x32xf32>
      %16 = vector.shape_cast %15 : vector<1x8x32xf32> to vector<8x32xf32>
      %17 = vector.shape_cast %14 : vector<8x32xf32> to vector<1x8x32xf32>
      tpu.vector_store %arg5[%c0_13, %c0_14, %c0_15], %17 {strides = array<i32>} : memref<1x8x32xf32, #tpu.memory_space<vmem>>, vector<1x8x32xf32>,
      %18 = vector.extract_strided_slice %13 {offsets = [0, 32], sizes = [8, 32], strides = [1, 1]} : vector<8x96xf32> to vector<8x32xf32>
      %c0_16 = arith.constant 0 : index
      %c0_17 = arith.constant 0 : index
      %c0_18 = arith.constant 0 : index
      %19 = vector.load %arg6[%c0_16, %c0_17, %c0_18] : memref<1x8x32xf32, #tpu.memory_space<vmem>>, vector<1x8x32xf32>
      %20 = vector.shape_cast %19 : vector<1x8x32xf32> to vector<8x32xf32>
      %21 = vector.shape_cast %18 : vector<8x32xf32> to vector<1x8x32xf32>
      tpu.vector_store %arg6[%c0_16, %c0_17, %c0_18], %21 {strides = array<i32>} : memref<1x8x32xf32, #tpu.memory_space<vmem>>, vector<1x8x32xf32>,
      %22 = vector.extract_strided_slice %13 {offsets = [0, 64], sizes = [8, 32], strides = [1, 1]} : vector<8x96xf32> to vector<8x32xf32>
      %c0_19 = arith.constant 0 : index
      %c0_20 = arith.constant 0 : index
      %c0_21 = arith.constant 0 : index
      %23 = vector.load %arg7[%c0_19, %c0_20, %c0_21] : memref<1x8x32xf32, #tpu.memory_space<vmem>>, vector<1x8x32xf32>
      %24 = vector.shape_cast %23 : vector<1x8x32xf32> to vector<8x32xf32>
      %25 = vector.shape_cast %22 : vector<8x32xf32> to vector<1x8x32xf32>
      tpu.vector_store %arg7[%c0_19, %c0_20, %c0_21], %25 {strides = array<i32>} : memref<1x8x32xf32, #tpu.memory_space<vmem>>, vector<1x8x32xf32>,
    } else {
    }
    return
  }
  func.func @transform_0(%arg0: i32, %arg1: i32, %arg2: i32) -> (i32, i32, i32) {
    %c0_i32 = arith.constant 0 : i32
    return %arg0, %arg1, %arg2 : i32, i32, i32
  }
  func.func @transform_1(%arg0: i32, %arg1: i32, %arg2: i32) -> (i32, i32) {
    %c0_i32 = arith.constant 0 : i32
    %c0_i32_0 = arith.constant 0 : i32
    return %arg2, %c0_i32 : i32, i32
  }
  func.func @transform_2(%arg0: i32, %arg1: i32, %arg2: i32) -> (i32, i32, i32) {
    %c0_i32 = arith.constant 0 : i32
    %c0_i32_0 = arith.constant 0 : i32
    return %arg0, %arg1, %c0_i32 : i32, i32, i32
  }
  func.func @transform_3(%arg0: i32, %arg1: i32, %arg2: i32) -> (i32, i32, i32) {
    %c0_i32 = arith.constant 0 : i32
    %c0_i32_0 = arith.constant 0 : i32
    return %arg0, %arg1, %c0_i32 : i32, i32, i32
  }
  func.func @transform_4(%arg0: i32, %arg1: i32, %arg2: i32) -> (i32, i32, i32) {
    %c0_i32 = arith.constant 0 : i32
    %c0_i32_0 = arith.constant 0 : i32
    return %arg0, %arg1, %c0_i32 : i32, i32, i32
  }
}

</mosaic_0001>

<llo_original>
// kernel: tpu_custom_call.1
$region0: #{tpu_custom_call.1}
  #allocation0 [shape = 'u32[]', space=smem, size = 0x4, offset = 0x4, fixed_abs, tag = 'smem constant byte address 0x4 - core index']
  #allocation1 [shape = 'u32[144,128]{1,0:T(1,128)}', space=vmem, size = 0x12000, scoped, tag = 'internal scratch']
  #allocation2 [shape = 'f32[8,96]{1,0:T(8,128)}', space=vmem, size = 0x1000, scoped, tag = 'scratch operand']
  %s0 = inlined_call_operand.hbm [shape: f32[2,16,32], index: 0, kind: input, shape index: {}]
  %s1 = inlined_call_operand.hbm [shape: f32[32,96], index: 1, kind: input, shape index: {}]
  %s2 = inlined_call_operand.hbm [shape: f32[2,16,32], index: 2, kind: output, shape index: {0}]
  %s3 = inlined_call_operand.hbm [shape: f32[2,16,32], index: 3, kind: output, shape index: {1}]
  %s4 = inlined_call_operand.hbm [shape: f32[2,16,32], index: 4, kind: output, shape index: {2}]
  %5 = xla_tuple %s2, %s3, %s4
  %s6 = sld [smem:[#allocation0]]
  $region73: #{tpu_custom_call.1} parent=0
    _
  %s8 = ssub.s32 1, %s6
  %s9 = scalar_select 0, %s8, %s6
  $region1: #{tpu_custom_call.1} parent=0
    #allocation3 [shape = 'u8[8192]{0}', space=vmem, size = 0x2000, scoped, tag = 'input window, operand 0']
    #allocation4 [shape = 's32[2]{0}', space=sflag, size = 0x8, scoped, tag = 'scoped memory for tpu_custom_call.1']
    #allocation5 [shape = 's32[2]{0}', space=sflag, size = 0x8, scoped, tag = 'scoped memory for tpu_custom_call.1']
    #allocation6 [shape = 'u8[16384]{0}', space=vmem, size = 0x4000, scoped, tag = 'input window, operand 1, single buffered']
    #allocation7 [shape = 's32[1]{0}', space=sflag, size = 0x4, scoped, tag = 'scoped memory for tpu_custom_call.1']
    #allocation8 [shape = 'u8[8192]{0}', space=vmem, size = 0x2000, scoped, tag = 'output window, operand 0']
    #allocation9 [shape = 'u8[8192]{0}', space=vmem, size = 0x2000, scoped, tag = 'output window, operand 1']
    #allocation10 [shape = 's32[2]{0}', space=sflag, size = 0x8, scoped, tag = 'scoped memory for tpu_custom_call.1']
    #allocation11 [shape = 'u8[8192]{0}', space=vmem, size = 0x2000, scoped, tag = 'output window, operand 2']
    %10 = vsyncpa [#allocation4], 0
    %s11 = scalar_lea.sflag [#allocation4], 1
    %12 = vsyncpa %s11, 0
    %13 = vsyncpa [#allocation7], 0
    %14 = vsyncpa [#allocation5], 0
    %s15 = scalar_lea.sflag [#allocation5], 1
    %16 = vsyncpa %s15, 0
    %17 = vsyncpa [#allocation10], 0
    %s18 = scalar_lea.sflag [#allocation10], 1
    %19 = vsyncpa %s18, 0
    loop: start=0, step=1, limit=6
    $region2: #{tpu_custom_call.1} parent=1 // loop_pre_header
      _
    $region3: #{tpu_custom_call.1} parent=1 // loop_header
      %s21 = sphi 0, %s25
      %p22 = scmp.ge.s32.totalorder %s21, 6
      %s28 = sphi 0, %s47
      %s29 = sphi 0, %s43
      %s30 = sphi 0, %s39
      %s31 = sphi 0, %s28
      %s32 = sphi 0, %s29
      %s33 = sphi 0, %s30
      %s34 = sphi 0, %s31
      %s35 = sphi 0, %s32
      %s36 = sphi 0, %s33
      %s54 = sphi 0, %s56
      %s57 = sphi 0, %s54
      %s58 = sphi 0, %s57
      %s74 = sphi 0, %s58
      %s80 = sphi 0, %s82
      %s83 = sphi 0, %s80
      %s84 = sphi 0, %s83
      %s100 = sphi 0, %s84
      %s108 = sphi 0, %s110
      %s111 = sphi 0, %s108
      %s112 = sphi 0, %s111
      %s128 = sphi 0, %s112
      %s136 = sphi 0, %s138
      %s139 = sphi 0, %s136
      %s140 = sphi 0, %s139
      %s156 = sphi 0, %s140
      %s164 = sphi 0, %s166
      %s167 = sphi 0, %s164
      %s168 = sphi 0, %s167
      %s184 = sphi 0, %s168
    $region4: #{tpu_custom_call.1} parent=1 // loop_header_branch
      %24 = sbr.rel (%p22) target = $region8
    $region5: #{tpu_custom_call.1} parent=1 // loop_body
      %s26 = ssub.s32 %s21, 1
      %s27 = ssub.s32 %s21, 2
      %s37 = sadd.s32 1, %s30
      %p38 = scmp.ge.s32.totalorder %s37, 1
      %s39 = scalar_select %p38, 0, %s37
      %s40 = sadd.s32 1, %s29
      %s41 = scalar_select %p38, %s40, %s29
      %p42 = scmp.ge.s32.totalorder %s41, 2
      %s43 = scalar_select %p42, 0, %s41
      %s44 = sadd.s32 1, %s28
      %s45 = scalar_select %p42, %s44, %s28
      %p46 = scmp.ge.s32.totalorder %s45, 2
      %s47 = scalar_select %p46, 0, %s45
      %s48 = ssub.s32 %s28, %s47
      %s49 = ssub.s32 %s29, %s43
      %s50 = sor.u32 %s48, %s49
      %s51 = ssub.s32 %s30, %s39
      %s52 = sor.u32 %s50, %s51
      %p53 = scmp.eq.s32.totalorder %s52, 0
      %s55 = sadd.s32 %s54, 1
      %s56 = scalar_select %p53, %s54, %s55
      %p59 = pneg %p53
      %p60 = scmp.eq.s32.totalorder %s21, 3
      %p61 = por %p59, %p60
      %p62 = scmp.ne.s32.totalorder %s54, %s57
      %p63 = scmp.eq.s32.totalorder %s21, 0
      %p64 = por %p62, %p63
      %p65 = scmp.ne.s32.totalorder %s54, %s57
      %p66 = scmp.eq.s32.totalorder %s26, 3
      %p67 = por %p65, %p66
      %p68 = scmp.ne.s32.totalorder %s57, %s58
      %p69 = scmp.eq.s32.totalorder %s26, 0
      %p70 = por %p68, %p69
      %p71 = scmp.ne.s32.totalorder %s57, %s58
      %p72 = scmp.eq.s32.totalorder %s27, 3
      %p73 = por %p71, %p72
      %p75 = scmp.ne.s32.totalorder %s58, %s74
      %p76 = scmp.eq.s32.totalorder %s27, 0
      %p77 = por %p75, %p76
      %s78 = ssub.s32 %s30, %s39
      %p79 = scmp.eq.s32.totalorder %s78, 0
      %s81 = sadd.s32 %s80, 1
      %s82 = scalar_select %p79, %s80, %s81
      %p85 = pneg %p79
      %p86 = scmp.eq.s32.totalorder %s21, 3
      %p87 = por %p85, %p86
      %p88 = scmp.ne.s32.totalorder %s80, %s83
      %p89 = scmp.eq.s32.totalorder %s21, 0
      %p90 = por %p88, %p89
      %p91 = scmp.ne.s32.totalorder %s80, %s83
      %p92 = scmp.eq.s32.totalorder %s26, 3
      %p93 = por %p91, %p92
      %p94 = scmp.ne.s32.totalorder %s83, %s84
      %p95 = scmp.eq.s32.totalorder %s26, 0
      %p96 = por %p94, %p95
      %p97 = scmp.ne.s32.totalorder %s83, %s84
      %p98 = scmp.eq.s32.totalorder %s27, 3
      %p99 = por %p97, %p98
      %p101 = scmp.ne.s32.totalorder %s84, %s100
      %p102 = scmp.eq.s32.totalorder %s27, 0
      %p103 = por %p101, %p102
      %s104 = ssub.s32 %s28, %s47
      %s105 = ssub.s32 %s29, %s43
      %s106 = sor.u32 %s104, %s105
      %p107 = scmp.eq.s32.totalorder %s106, 0
      %s109 = sadd.s32 %s108, 1
      %s110 = scalar_select %p107, %s108, %s109
      %p113 = pneg %p107
      %p114 = scmp.eq.s32.totalorder %s21, 3
      %p115 = por %p113, %p114
      %p116 = scmp.ne.s32.totalorder %s108, %s111
      %p117 = scmp.eq.s32.totalorder %s21, 0
      %p118 = por %p116, %p117
      %p119 = scmp.ne.s32.totalorder %s108, %s111
      %p120 = scmp.eq.s32.totalorder %s26, 3
      %p121 = por %p119, %p120
      %p122 = scmp.ne.s32.totalorder %s111, %s112
      %p123 = scmp.eq.s32.totalorder %s26, 0
      %p124 = por %p122, %p123
      %p125 = scmp.ne.s32.totalorder %s111, %s112
      %p126 = scmp.eq.s32.totalorder %s27, 3
      %p127 = por %p125, %p126
      %p129 = scmp.ne.s32.totalorder %s112, %s128
      %p130 = scmp.eq.s32.totalorder %s27, 0
      %p131 = por %p129, %p130
      %s132 = ssub.s32 %s28, %s47
      %s133 = ssub.s32 %s29, %s43
      %s134 = sor.u32 %s132, %s133
      %p135 = scmp.eq.s32.totalorder %s134, 0
      %s137 = sadd.s32 %s136, 1
      %s138 = scalar_select %p135, %s136, %s137
      %p141 = pneg %p135
      %p142 = scmp.eq.s32.totalorder %s21, 3
      %p143 = por %p141, %p142
      %p144 = scmp.ne.s32.totalorder %s136, %s139
      %p145 = scmp.eq.s32.totalorder %s21, 0
      %p146 = por %p144, %p145
      %p147 = scmp.ne.s32.totalorder %s136, %s139
      %p148 = scmp.eq.s32.totalorder %s26, 3
      %p149 = por %p147, %p148
      %p150 = scmp.ne.s32.totalorder %s139, %s140
      %p151 = scmp.eq.s32.totalorder %s26, 0
      %p152 = por %p150, %p151
      %p153 = scmp.ne.s32.totalorder %s139, %s140
      %p154 = scmp.eq.s32.totalorder %s27, 3
      %p155 = por %p153, %p154
      %p157 = scmp.ne.s32.totalorder %s140, %s156
      %p158 = scmp.eq.s32.totalorder %s27, 0
      %p159 = por %p157, %p158
      %s160 = ssub.s32 %s28, %s47
      %s161 = ssub.s32 %s29, %s43
      %s162 = sor.u32 %s160, %s161
      %p163 = scmp.eq.s32.totalorder %s162, 0
      %s165 = sadd.s32 %s164, 1
      %s166 = scalar_select %p163, %s164, %s165
      %p169 = pneg %p163
      %p170 = scmp.eq.s32.totalorder %s21, 3
      %p171 = por %p169, %p170
      %p172 = scmp.ne.s32.totalorder %s164, %s167
      %p173 = scmp.eq.s32.totalorder %s21, 0
      %p174 = por %p172, %p173
      %p175 = scmp.ne.s32.totalorder %s164, %s167
      %p176 = scmp.eq.s32.totalorder %s26, 3
      %p177 = por %p175, %p176
      %p178 = scmp.ne.s32.totalorder %s167, %s168
      %p179 = scmp.eq.s32.totalorder %s26, 0
      %p180 = por %p178, %p179
      %p181 = scmp.ne.s32.totalorder %s167, %s168
      %p182 = scmp.eq.s32.totalorder %s27, 3
      %p183 = por %p181, %p182
      %p185 = scmp.ne.s32.totalorder %s168, %s184
      %p186 = scmp.eq.s32.totalorder %s27, 0
      %p187 = por %p185, %p186
      %p188 = scmp.le.s32.totalorder 1, %s21
      %p189 = scmp.lt.s32.totalorder %s21, 5
      %p190 = pnand %p188, %p189
      %p191 = pneg %p190
      // Predicated region
      $region9: #{tpu_custom_call.1} parent=5 // pred_check
        _
      $region10: #{tpu_custom_call.1} parent=5 // pred_check_branch
        %193 = sbr.rel (%p190) target = $region12
      $region11: #{tpu_custom_call.1} parent=5 // pred_region
        %s194 = ssub.s32 %s21, 1
        // Predicated region
        $region13: #{tpu_custom_call.1} parent=11 // pred_check
          %p195 = pneg %p96
        $region14: #{tpu_custom_call.1} parent=11 // pred_check_branch
          %197 = sbr.rel (%p195) target = $region16
        $region15: #{tpu_custom_call.1} parent=11 // pred_region
          %s198 = smul.u32 4, %s33
          %s200 = ssub.s32 512, 512
          %201 = vsyncadd [#allocation7], %s200
          %s202 = smul.addr %s198, 128
          %s203 = scalar_lea.hbm %s1, %s202
          %s204 = sshll.u32 [#allocation6], 4
          %s205 = int_to_ptr.vmem [resolvable:$true] %s204
          %210 = dma.hbm_to_vmem [thread:$0]  %s203, 512, %s205, [#allocation7], 128, 128, 8
        $region16: #{tpu_custom_call.1} parent=11 // pred_fallthru
          _
      $region12: #{tpu_custom_call.1} parent=5 // pred_fallthru
        _
      %p211 = scmp.lt.s32.totalorder %s21, 4
      // Predicated region
      $region17: #{tpu_custom_call.1} parent=5 // pred_check
        %p212 = pneg %p211
      $region18: #{tpu_custom_call.1} parent=5 // pred_check_branch
        %214 = sbr.rel (%p212) target = $region20
      $region19: #{tpu_custom_call.1} parent=5 // pred_region
        // Predicated region
        $region21: #{tpu_custom_call.1} parent=19 // pred_check
          %p215 = pneg %p64
        $region22: #{tpu_custom_call.1} parent=19 // pred_check_branch
          %217 = sbr.rel (%p215) target = $region24
        $region23: #{tpu_custom_call.1} parent=19 // pred_region
          %s218 = sand.u32 %s54, 1
          %s219 = scalar_lea.sflag [#allocation4], %s218
          %s220 = sand.u32 %s54, 1
          %s221 = smul.addr %s220, 8
          %s222 = scalar_lea.vmem [#allocation3], %s221
          %s224 = ssub.s32 128, 128
          %225 = vsyncadd %s219, %s224
          %s226 = sadd.s32 %s30, %s29
          %s227 = smul.addr %s28, 2
          %s228 = sadd.s32 %s226, %s227
          %s229 = smul.addr %s228, 128
          %s230 = scalar_lea.hbm %s0, %s229
          %s232 = sshll.u32 %s222, 4
          %s233 = int_to_ptr.vmem [resolvable:$true] %s232
          %235 = dma.hbm_to_vmem [thread:$0]  %s230, 128, %s233, %s219
        $region24: #{tpu_custom_call.1} parent=19 // pred_fallthru
          _
      $region20: #{tpu_custom_call.1} parent=5 // pred_fallthru
        _
      %p236 = scmp.le.s32.totalorder 1, %s21
      %p237 = scmp.lt.s32.totalorder %s21, 5
      %p238 = pnand %p236, %p237
      %p239 = pneg %p238
      // Predicated region
      $region25: #{tpu_custom_call.1} parent=5 // pred_check
        _
      $region26: #{tpu_custom_call.1} parent=5 // pred_check_branch
        %241 = sbr.rel (%p238) target = $region28
      $region27: #{tpu_custom_call.1} parent=5 // pred_region
        %s242 = ssub.s32 %s21, 1
        %s243 = sand.u32 %s57, 1
        %s244 = scalar_lea.sflag [#allocation4], %s243
        %s245 = sand.u32 %s57, 1
        %s246 = smul.addr %s245, 8
        %s247 = scalar_lea.vmem [#allocation3], %s246
        // Predicated region
        $region29: #{tpu_custom_call.1} parent=27 // pred_check
          %p248 = pneg %p70
        $region30: #{tpu_custom_call.1} parent=27 // pred_check_branch
          %250 = sbr.rel (%p248) target = $region32
        $region31: #{tpu_custom_call.1} parent=27 // pred_region
          %251 = dma.done %s244, 128
        $region32: #{tpu_custom_call.1} parent=27 // pred_fallthru
          _
        // Predicated region
        $region33: #{tpu_custom_call.1} parent=27 // pred_check
          %p252 = pneg %p96
        $region34: #{tpu_custom_call.1} parent=27 // pred_check_branch
          %254 = sbr.rel (%p252) target = $region36
        $region35: #{tpu_custom_call.1} parent=27 // pred_region
          %255 = dma.done [#allocation7], 512
        $region36: #{tpu_custom_call.1} parent=27 // pred_fallthru
          _
        %s256 = sand.u32 %s57, 1
        %s257 = scalar_lea.sflag [#allocation4], %s256
        %s258 = sand.u32 %s57, 1
        %s259 = smul.addr %s258, 8
        %s260 = scalar_lea.vmem [#allocation3], %s259
        %p261 = pneg %p70
        %p262 = pneg %p67
        %p263 = pneg %p96
        %p264 = pneg %p93
        %p265 = pneg %p124
        %p266 = pneg %p121
        %s267 = sand.u32 %s111, 1
        %s268 = scalar_lea.sflag [#allocation5], %s267
        %s269 = sand.u32 %s111, 1
        %s270 = smul.addr %s269, 8
        %s271 = scalar_lea.vmem [#allocation8], %s270
        %p272 = pneg %p152
        %p273 = pneg %p149
        %s274 = sand.u32 %s26, 1
        %s275 = scalar_lea.sflag [#allocation10], %s274
        %s276 = sand.u32 %s139, 1
        %s277 = smul.addr %s276, 8
        %s278 = scalar_lea.vmem [#allocation9], %s277
        %p279 = pneg %p180
        %p280 = pneg %p177
        %s281 = sand.u32 %s26, 1
        %s282 = scalar_lea.sflag [#allocation10], %s281
        %s283 = sand.u32 %s167, 1
        %s284 = smul.addr %s283, 8
        %s285 = scalar_lea.vmem [#allocation11], %s284
        %s286 = smul.u32 4, %s33
        %p287 = scmp.eq.s32.totalorder %s33, 0
        // Predicated region
        $region37: #{tpu_custom_call.1} parent=27 // pred_check
          %p288 = pneg %p287
        $region38: #{tpu_custom_call.1} parent=27 // pred_check_branch
          %290 = sbr.rel (%p288) target = $region40
        $region39: #{tpu_custom_call.1} parent=27 // pred_region
          %vm291 = vcmask 785408
          %292 = vst.msk [vmem:[#allocation2] sm:$0xff] %vm291, 0.0
        $region40: #{tpu_custom_call.1} parent=27 // pred_fallthru
          _
        %v293 = vld [vmem:[%s247] sm:$0xff]
        %v294 = vld [vmem:[#allocation2] sm:$0xff]
        %v295 = vld [vmem:[#allocation6] sm:$0xff]
        %v296 = vld [vmem:[#allocation6 + $0x8] sm:$0xff]
        %v297 = vld [vmem:[#allocation6 + $0x10] sm:$0xff]
        %v298 = vld [vmem:[#allocation6 + $0x18] sm:$0xff]
        %vm299 = vcmask 261120
        %v301 = vsel %vm299, %v293, 0
        %303 = vmatprep.subr.mxu0 0.0
        %304 = vmatpush1.msra.mxu0 0.0
        %305 = vmatprep.subr.mxu0 0.0
        %306 = vmatpush1.msra.mxu0 0.0
        %307 = vmatprep.subr.mxu0 0.0
        %308 = vmatpush1.msra.mxu0 0.0
        %309 = vmatprep.subr.mxu0 0.0
        %310 = vmatpush1.msra.mxu0 0.0
        %311 = vmatprep.subr.mxu0 0.0
        %312 = vmatpush1.msra.mxu0 0.0
        %313 = vmatprep.subr.mxu0 0.0
        %314 = vmatpush1.msra.mxu0 0.0
        %315 = vmatprep.subr.mxu0 0.0
        %316 = vmatpush1.msra.mxu0 0.0
        %317 = vmatprep.subr.mxu0 0.0
        %318 = vmatpush1.msra.mxu0 0.0
        %319 = vmatprep.subr.mxu0 0.0
        %320 = vmatpush1.msra.mxu0 0.0
        %321 = vmatprep.subr.mxu0 0.0
        %322 = vmatpush1.msra.mxu0 0.0
        %323 = vmatprep.subr.mxu0 0.0
        %324 = vmatpush1.msra.mxu0 0.0
        %325 = vmatprep.subr.mxu0 0.0
        %326 = vmatpush1.msra.mxu0 0.0
        %327 = vmatprep.subr.mxu0 0.0
        %328 = vmatpush1.msra.mxu0 %v298
        %329 = vmatprep.subr.mxu0 0.0
        %330 = vmatpush1.msra.mxu0 %v297
        %331 = vmatprep.subr.mxu0 0.0
        %332 = vmatpush1.msra.mxu0 %v296
        %333 = vmatprep.subr.mxu0 0.0
        %334 = vmatpush1.msra.mxu0 %v295
        %335 = vmatprep.subr.mxu0 0.0
        %336 = vmatpush2.msra.mxu0 0.0
        %337 = vmatprep.subr.mxu0 0.0
        %338 = vmatpush2.msra.mxu0 0.0
        %339 = vmatprep.subr.mxu0 0.0
        %340 = vmatpush2.msra.mxu0 0.0
        %341 = vmatprep.subr.mxu0 0.0
        %342 = vmatpush2.msra.mxu0 0.0
        %343 = vmatprep.subr.mxu0 0.0
        %344 = vmatpush2.msra.mxu0 0.0
        %345 = vmatprep.subr.mxu0 0.0
        %346 = vmatpush2.msra.mxu0 0.0
        %347 = vmatprep.subr.mxu0 0.0
        %348 = vmatpush2.msra.mxu0 0.0
        %349 = vmatprep.subr.mxu0 0.0
        %350 = vmatpush2.msra.mxu0 0.0
        %351 = vmatprep.subr.mxu0 0.0
        %352 = vmatpush2.msra.mxu0 0.0
        %353 = vmatprep.subr.mxu0 0.0
        %354 = vmatpush2.msra.mxu0 0.0
        %355 = vmatprep.subr.mxu0 0.0
        %356 = vmatpush2.msra.mxu0 0.0
        %357 = vmatprep.subr.mxu0 0.0
        %358 = vmatpush2.msra.mxu0 0.0
        %359 = vmatprep.subr.mxu0 0.0
        %360 = vmatpush2.msra.mxu0 0.0
        %361 = vmatprep.subr.mxu0 0.0
        %362 = vmatpush2.msra.mxu0 0.0
        %363 = vmatprep.subr.mxu0 0.0
        %364 = vmatpush2.msra.mxu0 0.0
        %365 = vmatprep.subr.mxu0 0.0
        %366 = vmatpush2.msra.mxu0 0.0
        %367 = vmatprep.mubr.f32.mxu0 0.0
        %368 = vmatmul.mubr.f32.gmra.mxu0 %v301
        %v369 = vpop.f32.mrf.mxu0
        %v370 = vadd.f32 0.0, %v369
        %v371 = vpop.f32.mrf.mxu0
        %372 = vdwg.mxu0
        %v373 = vadd.f32 %v294, %v370
        %vm374 = vcmask 785408
        %375 = vst.msk [vmem:[#allocation2] sm:$0xff] %vm374, %v373
        // Predicated region
        $region41: #{tpu_custom_call.1} parent=27 // pred_check
          %p376 = pneg %p287
        $region42: #{tpu_custom_call.1} parent=27 // pred_check_branch
          %378 = sbr.rel (%p376) target = $region44
        $region43: #{tpu_custom_call.1} parent=27 // pred_region
          %v379 = vld [vmem:[#allocation2] sm:$0xff]
          %380 = vst.msk [vmem:[%s271] sm:$0xff] %vm299, %v379
          %382 = vrot.lane.b32.xlu0 %v379, 96
          %v383 = vpop.permute.xlu0 %382
          %385 = vst.msk [vmem:[%s278] sm:$0xff] %vm299, %v383
          %386 = vrot.lane.b32.xlu0 %v379, 64
          %v387 = vpop.permute.xlu0 %386
          %389 = vst.msk [vmem:[%s285] sm:$0xff] %vm299, %v387
        $region44: #{tpu_custom_call.1} parent=27 // pred_fallthru
          _
        %s390 = sand.u32 %s111, 1
        %s391 = scalar_lea.sflag [#allocation5], %s390
        %s392 = sand.u32 %s111, 1
        %s393 = smul.addr %s392, 8
        %s394 = scalar_lea.vmem [#allocation8], %s393
        %s395 = sand.u32 %s26, 1
        %s396 = scalar_lea.sflag [#allocation10], %s395
        %s397 = sand.u32 %s139, 1
        %s398 = smul.addr %s397, 8
        %s399 = scalar_lea.vmem [#allocation9], %s398
        %s400 = sand.u32 %s26, 1
        %s401 = scalar_lea.sflag [#allocation10], %s400
        %s402 = sand.u32 %s167, 1
        %s403 = smul.addr %s402, 8
        %s404 = scalar_lea.vmem [#allocation11], %s403
        // Predicated region
        $region45: #{tpu_custom_call.1} parent=27 // pred_check
          %p405 = pneg %p121
        $region46: #{tpu_custom_call.1} parent=27 // pred_check_branch
          %407 = sbr.rel (%p405) target = $region48
        $region47: #{tpu_custom_call.1} parent=27 // pred_region
          %s409 = ssub.s32 128, 128
          %410 = vsyncadd %s391, %s409
          %s411 = smul.addr %s31, 2
          %s412 = sadd.s32 %s32, %s411
          %s413 = smul.addr %s412, 128
          %s414 = scalar_lea.hbm %s2, %s413
          %s416 = sshll.u32 %s394, 4
          %s417 = int_to_ptr.vmem [resolvable:$true] %s416
          %419 = dma.vmem_to_hbm [thread:$0]  %s417, 128, %s414, %s391
        $region48: #{tpu_custom_call.1} parent=27 // pred_fallthru
          _
        // Predicated region
        $region49: #{tpu_custom_call.1} parent=27 // pred_check
          %p420 = pneg %p149
        $region50: #{tpu_custom_call.1} parent=27 // pred_check_branch
          %422 = sbr.rel (%p420) target = $region52
        $region51: #{tpu_custom_call.1} parent=27 // pred_region
          %s424 = ssub.s32 128, 128
          %425 = vsyncadd %s396, %s424
          %s426 = smul.addr %s31, 2
          %s427 = sadd.s32 %s32, %s426
          %s428 = smul.addr %s427, 128
          %s429 = scalar_lea.hbm %s3, %s428
          %s431 = sshll.u32 %s399, 4
          %s432 = int_to_ptr.vmem [resolvable:$true] %s431
          %434 = dma.vmem_to_hbm [thread:$0]  %s432, 128, %s429, %s396
        $region52: #{tpu_custom_call.1} parent=27 // pred_fallthru
          _
        // Predicated region
        $region53: #{tpu_custom_call.1} parent=27 // pred_check
          %p435 = pneg %p177
        $region54: #{tpu_custom_call.1} parent=27 // pred_check_branch
          %437 = sbr.rel (%p435) target = $region56
        $region55: #{tpu_custom_call.1} parent=27 // pred_region
          %s439 = ssub.s32 128, 128
          %440 = vsyncadd %s401, %s439
          %s441 = smul.addr %s31, 2
          %s442 = sadd.s32 %s32, %s441
          %s443 = smul.addr %s442, 128
          %s444 = scalar_lea.hbm %s4, %s443
          %s446 = sshll.u32 %s404, 4
          %s447 = int_to_ptr.vmem [resolvable:$true] %s446
          %449 = dma.vmem_to_hbm [thread:$0]  %s447, 128, %s444, %s401
        $region56: #{tpu_custom_call.1} parent=27 // pred_fallthru
          _
      $region28: #{tpu_custom_call.1} parent=5 // pred_fallthru
        _
      %p450 = scmp.le.s32.totalorder 2, %s21
      // Predicated region
      $region57: #{tpu_custom_call.1} parent=5 // pred_check
        %p451 = pneg %p450
      $region58: #{tpu_custom_call.1} parent=5 // pred_check_branch
        %453 = sbr.rel (%p451) target = $region60
      $region59: #{tpu_custom_call.1} parent=5 // pred_region
        %s454 = ssub.s32 %s21, 2
        // Predicated region
        $region61: #{tpu_custom_call.1} parent=59 // pred_check
          %p455 = pneg %p127
        $region62: #{tpu_custom_call.1} parent=59 // pred_check_branch
          %457 = sbr.rel (%p455) target = $region64
        $region63: #{tpu_custom_call.1} parent=59 // pred_region
          %s458 = sand.u32 %s112, 1
          %s459 = scalar_lea.sflag [#allocation5], %s458
          %s460 = sand.u32 %s112, 1
          %s461 = smul.addr %s460, 8
          %s462 = scalar_lea.vmem [#allocation8], %s461
          %463 = dma.done %s459, 128
        $region64: #{tpu_custom_call.1} parent=59 // pred_fallthru
          _
        // Predicated region
        $region65: #{tpu_custom_call.1} parent=59 // pred_check
          %p464 = pneg %p155
        $region66: #{tpu_custom_call.1} parent=59 // pred_check_branch
          %466 = sbr.rel (%p464) target = $region68
        $region67: #{tpu_custom_call.1} parent=59 // pred_region
          %s467 = sand.u32 %s27, 1
          %s468 = scalar_lea.sflag [#allocation10], %s467
          %s469 = sand.u32 %s140, 1
          %s470 = smul.addr %s469, 8
          %s471 = scalar_lea.vmem [#allocation9], %s470
          %472 = dma.done %s468, 128
        $region68: #{tpu_custom_call.1} parent=59 // pred_fallthru
          _
        // Predicated region
        $region69: #{tpu_custom_call.1} parent=59 // pred_check
          %p473 = pneg %p183
        $region70: #{tpu_custom_call.1} parent=59 // pred_check_branch
          %475 = sbr.rel (%p473) target = $region72
        $region71: #{tpu_custom_call.1} parent=59 // pred_region
          %s476 = sand.u32 %s27, 1
          %s477 = scalar_lea.sflag [#allocation10], %s476
          %s478 = sand.u32 %s168, 1
          %s479 = smul.addr %s478, 8
          %s480 = scalar_lea.vmem [#allocation11], %s479
          %481 = dma.done %s477, 128
        $region72: #{tpu_custom_call.1} parent=59 // pred_fallthru
          _
      $region60: #{tpu_custom_call.1} parent=5 // pred_fallthru
        _
    $region6: #{tpu_custom_call.1} parent=1 // loop_footer
      %s25 = sadd.s32 1, %s21
    $region7: #{tpu_custom_call.1} parent=1 // loop_footer_branch
      %20 = sbr.rel target = $region3
    $region8: #{tpu_custom_call.1} parent=1 // loop_exit
      _
    %482 = vsyncpa [#allocation4], 1
    %s483 = scalar_lea.sflag [#allocation4], 1
    %484 = vsyncpa %s483, 1
    %485 = vsyncpa [#allocation7], 1
    %486 = vsyncpa [#allocation5], 1
    %s487 = scalar_lea.sflag [#allocation5], 1
    %488 = vsyncpa %s487, 1
    %489 = vsyncpa [#allocation10], 1
    %s490 = scalar_lea.sflag [#allocation10], 1
    %491 = vsyncpa %s490, 1

</llo_original>
